<compile_context>
chip_gen: v5e
topology: v5e:2x2
jax: 0.10.0
libtpu: 0.0.40
codegen_flags: <defaults>
</compile_context>

<pallas_src>
import functools

import jax
import jax.numpy as jnp
from jax.experimental import pallas as pl
from jax.experimental.pallas import tpu as pltpu


def _discriminator_kernel(params_ref, x_ref, out_ref):
    # params_ref: SMEM (19,) f32 =
    #   [0:12]  a1[k*3+j] = 0.5 * w1[k, j]      (w1 in (in=4, out=3) layout)
    #   [12:15] c1[j]     = 0.5 * b1[j]
    #   [15:18] a2[j]     = 0.25 * w2[j]
    #   [18]    c2        = 0.25 * sum(w2) + 0.5 * b2
    # so that with t_j = tanh(sum_k a1[k,j] x_k + c1[j]):
    #   sigmoid(w1^T x + b1)_j = 0.5 t_j + 0.5
    #   sigmoid(w2^T h + b2)   = 0.5 tanh(sum_j a2[j] t_j + c2) + 0.5
    #
    # x_ref:   VMEM (4, 1, 8, L) f32  -- batch folded onto (sublane, lane)
    # out_ref: VMEM (1, 8, L) f32
    x = x_ref[...]                                # (4, 1, 8, L)
    xs = [x[k] for k in range(4)]                 # four dense (1, 8, L) planes

    # Layer 1: Linear(4, 3) + sigmoid (tanh form), scalar-weight VPU FMAs.
    ts = []
    for j in range(3):
        acc = xs[0] * params_ref[j]               # a1[0, j]
        for k in range(1, 4):
            acc = acc + xs[k] * params_ref[k * 3 + j]
        acc = acc + params_ref[12 + j]            # c1[j]
        ts.append(jnp.tanh(acc))                  # EUP, one op per element

    # Layer 2: Linear(3, 1) + sigmoid (tanh form), constants pre-folded.
    u = ts[0] * params_ref[15] + ts[1] * params_ref[16] + ts[2] * params_ref[17]
    u = u + params_ref[18]
    out_ref[...] = 0.5 * jnp.tanh(u) + 0.5        # full-vreg, lane-dense store


def _default_block_samples():
    # Per-generation tile sizing (review: v5e ~128K, v6e/v7x ~256K+).
    try:
        kind = jax.devices()[0].device_kind.lower()
    except Exception:
        return 131072
    if "v5e" in kind or "v5 lite" in kind or "v5lite" in kind:
        return 131072
    return 262144


@functools.partial(jax.jit, static_argnames=("block_samples",))
def discriminator_forward(x, w1, b1, w2, b2, *, block_samples=None):
    """x: (B, 4) f32 -> (B, 1) f32.

    Weight layout is (in, out): w1 (4, 3), b1 (3,), w2 (3, 1) or (3,), b2 (1,)
    or scalar.  NOTE: a PyTorch nn.Linear state_dict stores (out, in) — the
    caller must transpose those weights before passing them here.
    """
    if block_samples is None:
        block_samples = _default_block_samples()

    x = x.astype(jnp.float32)
    assert x.ndim == 2 and x.shape[1] == 4, x.shape
    B = x.shape[0]

    w1 = jnp.asarray(w1, jnp.float32)
    assert w1.shape == (4, 3), (
        "w1 must be (in=4, out=3); transpose a PyTorch (out,in) weight")
    b1 = jnp.asarray(b1, jnp.float32).reshape(3)
    w2 = jnp.asarray(w2, jnp.float32)
    assert w2.size == 3, "w2 must have 3 elements ((3,1) or (3,))"
    w2 = w2.reshape(3)
    b2 = jnp.asarray(b2, jnp.float32).reshape(())

    # Fold the sigmoid-as-tanh 0.5/0.25 scalings into the 19 parameters
    # (host-side scalar math only; no extra HBM pass over activations).
    a1 = 0.5 * w1                                  # (4, 3)
    c1 = 0.5 * b1                                  # (3,)
    a2 = 0.25 * w2                                 # (3,)
    c2 = 0.25 * jnp.sum(w2) + 0.5 * b2             # scalar
    params = jnp.concatenate(
        [a1.reshape(-1), c1, a2, c2.reshape(1)]).astype(jnp.float32)  # (19,)

    # --- Tile sizing: tb samples per grid step, tb a multiple of 8*128. ---
    def cdiv(a, b):
        return -(-a // b)

    ROW = 8 * 128                                  # one dense (8,128) vreg tile
    max_tb = max(ROW, (int(block_samples) // ROW) * ROW)
    n_steps = cdiv(B, max_tb)                      # grid size
    tb = cdiv(cdiv(B, n_steps), ROW) * ROW         # minimizes padding waste
    L = tb // 8                                    # lane extent (multiple of 128)
    Bp = n_steps * tb

    # Layout plumbing (fused by jit into one pass): batch onto (sublane, lane).
    xT = x.T                                       # (4, B)
    if Bp != B:
        xT = jnp.pad(xT, ((0, 0), (0, Bp - B)))
    x4 = xT.reshape(4, n_steps, 8, L)              # contiguous (free) reshape

    out3 = pl.pallas_call(
        _discriminator_kernel,
        out_shape=jax.ShapeDtypeStruct((n_steps, 8, L), jnp.float32),
        grid=(n_steps,),
        in_specs=[
            pl.BlockSpec(memory_space=pltpu.MemorySpace.SMEM),      # params
            pl.BlockSpec((4, 1, 8, L), lambda i: (0, i, 0, 0)),     # x tile
        ],
        out_specs=pl.BlockSpec((1, 8, L), lambda i: (i, 0, 0)),     # dense out
        compiler_params=pltpu.CompilerParams(
            dimension_semantics=("parallel",),     # megacore / v7x 2-TC sharding
            vmem_limit_bytes=48 * 1024 * 1024,     # ~40*tb pipeline + temps
        ),
    )(params, x4)

    out = out3.reshape(Bp, 1)                      # contiguous (free) reshape
    if Bp != B:
        out = out[:B]
    return out


def _reference_forward(x, w1, b1, w2, b2):
    h = jax.nn.sigmoid(x @ w1 + b1)
    return jax.nn.sigmoid(h @ w2 + b2)


if __name__ == "__main__":
    key = jax.random.PRNGKey(0)
    k_x, k_w1, k_b1, k_w2, k_b2 = jax.random.split(key, 5)

    # PyTorch Linear default init: U(-1/sqrt(fan_in), 1/sqrt(fan_in)),
    # expressed here directly in (in, out) layout.
    w1 = jax.random.uniform(k_w1, (4, 3), jnp.float32, -0.5, 0.5)   # 1/sqrt(4)
    b1 = jax.random.uniform(k_b1, (3,), jnp.float32, -0.5, 0.5)
    bound2 = 1.0 / jnp.sqrt(3.0)
    w2 = jax.random.uniform(k_w2, (3, 1), jnp.float32, -bound2, bound2)
    b2 = jax.random.uniform(k_b2, (1,), jnp.float32, -bound2, bound2)

    # Test 1: ragged batch (exercises the padding + [:B] slice path).
    B = 200
    x = jax.random.normal(k_x, (B, 4), jnp.float32)
    out = jax.block_until_ready(discriminator_forward(x, w1, b1, w2, b2))
    ref = _reference_forward(x, w1, b1, w2, b2)
    assert out.shape == (B, 1), out.shape
    assert jnp.allclose(out, ref, atol=1e-5, rtol=1e-5)

    # Test 2: multi-step grid with no padding (exercises pipelining and the
    # pad-free fast path) using a small explicit tile.
    B2 = 4096
    x2 = jax.random.normal(jax.random.PRNGKey(1), (B2, 4), jnp.float32)
    out2 = jax.block_until_ready(
        discriminator_forward(x2, w1, b1, w2, b2, block_samples=2048))
    ref2 = _reference_forward(x2, w1, b1, w2, b2)
    assert out2.shape == (B2, 1), out2.shape
    assert jnp.allclose(out2, ref2, atol=1e-5, rtol=1e-5)

    print("KERNEL_OK")
</pallas_src>

<mosaic_0001>
module attributes {stable_mosaic.version = 11 : i64} {
  func.func @_discriminator_kernel(%arg0: i32, %arg1: memref<19xf32, #tpu.memory_space<smem>>, %arg2: memref<4x1x8x128xf32, #tpu.memory_space<vmem>>, %arg3: memref<1x8x128xf32, #tpu.memory_space<vmem>>) attributes {dimension_semantics = [#tpu.dimension_semantics<parallel>], iteration_bounds = array<i64: 1>, scalar_prefetch = 0 : i64, scratch_operands = 0 : i64, tpu.core_type = #tpu.core_type<tc>, window_params = [{transform_indices = @transform_0, window_bounds = array<i64: 19>}, {transform_indices = @transform_1, window_bounds = array<i64: 4, 1, 8, 128>}, {transform_indices = @transform_2, window_bounds = array<i64: 1, 8, 128>}]} {
    %c0 = arith.constant 0 : index
    %c0_0 = arith.constant 0 : index
    %c0_1 = arith.constant 0 : index
    %c0_2 = arith.constant 0 : index
    %0 = vector.load %arg2[%c0, %c0_0, %c0_1, %c0_2] : memref<4x1x8x128xf32, #tpu.memory_space<vmem>>, vector<4x1x8x128xf32>
    %1 = vector.extract_strided_slice %0 {offsets = [0, 0, 0, 0], sizes = [1, 1, 8, 128], strides = [1, 1, 1, 1]} : vector<4x1x8x128xf32> to vector<1x1x8x128xf32>
    %2 = vector.shape_cast %1 : vector<1x1x8x128xf32> to vector<1x8x128xf32>
    %3 = vector.extract_strided_slice %0 {offsets = [1, 0, 0, 0], sizes = [1, 1, 8, 128], strides = [1, 1, 1, 1]} : vector<4x1x8x128xf32> to vector<1x1x8x128xf32>
    %4 = vector.shape_cast %3 : vector<1x1x8x128xf32> to vector<1x8x128xf32>
    %5 = vector.extract_strided_slice %0 {offsets = [2, 0, 0, 0], sizes = [1, 1, 8, 128], strides = [1, 1, 1, 1]} : vector<4x1x8x128xf32> to vector<1x1x8x128xf32>
    %6 = vector.shape_cast %5 : vector<1x1x8x128xf32> to vector<1x8x128xf32>
    %7 = vector.extract_strided_slice %0 {offsets = [3, 0, 0, 0], sizes = [1, 1, 8, 128], strides = [1, 1, 1, 1]} : vector<4x1x8x128xf32> to vector<1x1x8x128xf32>
    %8 = vector.shape_cast %7 : vector<1x1x8x128xf32> to vector<1x8x128xf32>
    %c0_3 = arith.constant 0 : index
    %9 = memref.load %arg1[%c0_3] : memref<19xf32, #tpu.memory_space<smem>>
    %10 = vector.broadcast %9 : f32 to vector<1x8x128xf32>
    %11 = arith.mulf %2, %10 : vector<1x8x128xf32>
    %c3 = arith.constant 3 : index
    %12 = memref.load %arg1[%c3] : memref<19xf32, #tpu.memory_space<smem>>
    %13 = vector.broadcast %12 : f32 to vector<1x8x128xf32>
    %14 = arith.mulf %4, %13 : vector<1x8x128xf32>
    %15 = arith.addf %11, %14 : vector<1x8x128xf32>
    %c6 = arith.constant 6 : index
    %16 = memref.load %arg1[%c6] : memref<19xf32, #tpu.memory_space<smem>>
    %17 = vector.broadcast %16 : f32 to vector<1x8x128xf32>
    %18 = arith.mulf %6, %17 : vector<1x8x128xf32>
    %19 = arith.addf %15, %18 : vector<1x8x128xf32>
    %c9 = arith.constant 9 : index
    %20 = memref.load %arg1[%c9] : memref<19xf32, #tpu.memory_space<smem>>
    %21 = vector.broadcast %20 : f32 to vector<1x8x128xf32>
    %22 = arith.mulf %8, %21 : vector<1x8x128xf32>
    %23 = arith.addf %19, %22 : vector<1x8x128xf32>
    %c12 = arith.constant 12 : index
    %24 = memref.load %arg1[%c12] : memref<19xf32, #tpu.memory_space<smem>>
    %25 = vector.broadcast %24 : f32 to vector<1x8x128xf32>
    %26 = arith.addf %23, %25 : vector<1x8x128xf32>
    %27 = math.tanh %26 : vector<1x8x128xf32>
    %c1 = arith.constant 1 : index
    %28 = memref.load %arg1[%c1] : memref<19xf32, #tpu.memory_space<smem>>
    %29 = vector.broadcast %28 : f32 to vector<1x8x128xf32>
    %30 = arith.mulf %2, %29 : vector<1x8x128xf32>
    %c4 = arith.constant 4 : index
    %31 = memref.load %arg1[%c4] : memref<19xf32, #tpu.memory_space<smem>>
    %32 = vector.broadcast %31 : f32 to vector<1x8x128xf32>
    %33 = arith.mulf %4, %32 : vector<1x8x128xf32>
    %34 = arith.addf %30, %33 : vector<1x8x128xf32>
    %c7 = arith.constant 7 : index
    %35 = memref.load %arg1[%c7] : memref<19xf32, #tpu.memory_space<smem>>
    %36 = vector.broadcast %35 : f32 to vector<1x8x128xf32>
    %37 = arith.mulf %6, %36 : vector<1x8x128xf32>
    %38 = arith.addf %34, %37 : vector<1x8x128xf32>
    %c10 = arith.constant 10 : index
    %39 = memref.load %arg1[%c10] : memref<19xf32, #tpu.memory_space<smem>>
    %40 = vector.broadcast %39 : f32 to vector<1x8x128xf32>
    %41 = arith.mulf %8, %40 : vector<1x8x128xf32>
    %42 = arith.addf %38, %41 : vector<1x8x128xf32>
    %c13 = arith.constant 13 : index
    %43 = memref.load %arg1[%c13] : memref<19xf32, #tpu.memory_space<smem>>
    %44 = vector.broadcast %43 : f32 to vector<1x8x128xf32>
    %45 = arith.addf %42, %44 : vector<1x8x128xf32>
    %46 = math.tanh %45 : vector<1x8x128xf32>
    %c2 = arith.constant 2 : index
    %47 = memref.load %arg1[%c2] : memref<19xf32, #tpu.memory_space<smem>>
    %48 = vector.broadcast %47 : f32 to vector<1x8x128xf32>
    %49 = arith.mulf %2, %48 : vector<1x8x128xf32>
    %c5 = arith.constant 5 : index
    %50 = memref.load %arg1[%c5] : memref<19xf32, #tpu.memory_space<smem>>
    %51 = vector.broadcast %50 : f32 to vector<1x8x128xf32>
    %52 = arith.mulf %4, %51 : vector<1x8x128xf32>
    %53 = arith.addf %49, %52 : vector<1x8x128xf32>
    %c8 = arith.constant 8 : index
    %54 = memref.load %arg1[%c8] : memref<19xf32, #tpu.memory_space<smem>>
    %55 = vector.broadcast %54 : f32 to vector<1x8x128xf32>
    %56 = arith.mulf %6, %55 : vector<1x8x128xf32>
    %57 = arith.addf %53, %56 : vector<1x8x128xf32>
    %c11 = arith.constant 11 : index
    %58 = memref.load %arg1[%c11] : memref<19xf32, #tpu.memory_space<smem>>
    %59 = vector.broadcast %58 : f32 to vector<1x8x128xf32>
    %60 = arith.mulf %8, %59 : vector<1x8x128xf32>
    %61 = arith.addf %57, %60 : vector<1x8x128xf32>
    %c14 = arith.constant 14 : index
    %62 = memref.load %arg1[%c14] : memref<19xf32, #tpu.memory_space<smem>>
    %63 = vector.broadcast %62 : f32 to vector<1x8x128xf32>
    %64 = arith.addf %61, %63 : vector<1x8x128xf32>
    %65 = math.tanh %64 : vector<1x8x128xf32>
    %c15 = arith.constant 15 : index
    %66 = memref.load %arg1[%c15] : memref<19xf32, #tpu.memory_space<smem>>
    %67 = vector.broadcast %66 : f32 to vector<1x8x128xf32>
    %68 = arith.mulf %27, %67 : vector<1x8x128xf32>
    %c16 = arith.constant 16 : index
    %69 = memref.load %arg1[%c16] : memref<19xf32, #tpu.memory_space<smem>>
    %70 = vector.broadcast %69 : f32 to vector<1x8x128xf32>
    %71 = arith.mulf %46, %70 : vector<1x8x128xf32>
    %72 = arith.addf %68, %71 : vector<1x8x128xf32>
    %c17 = arith.constant 17 : index
    %73 = memref.load %arg1[%c17] : memref<19xf32, #tpu.memory_space<smem>>
    %74 = vector.broadcast %73 : f32 to vector<1x8x128xf32>
    %75 = arith.mulf %65, %74 : vector<1x8x128xf32>
    %76 = arith.addf %72, %75 : vector<1x8x128xf32>
    %c18 = arith.constant 18 : index
    %77 = memref.load %arg1[%c18] : memref<19xf32, #tpu.memory_space<smem>>
    %78 = vector.broadcast %77 : f32 to vector<1x8x128xf32>
    %79 = arith.addf %76, %78 : vector<1x8x128xf32>
    %80 = math.tanh %79 : vector<1x8x128xf32>
    %cst = arith.constant 5.000000e-01 : f32
    %81 = vector.broadcast %cst : f32 to vector<1x8x128xf32>
    %82 = arith.mulf %81, %80 : vector<1x8x128xf32>
    %cst_4 = arith.constant 5.000000e-01 : f32
    %83 = vector.broadcast %cst_4 : f32 to vector<1x8x128xf32>
    %84 = arith.addf %82, %83 : vector<1x8x128xf32>
    %c0_5 = arith.constant 0 : index
    %c0_6 = arith.constant 0 : index
    %c0_7 = arith.constant 0 : index
    %85 = vector.load %arg3[%c0_5, %c0_6, %c0_7] : memref<1x8x128xf32, #tpu.memory_space<vmem>>, vector<1x8x128xf32>
    tpu.vector_store %arg3[%c0_5, %c0_6, %c0_7], %84 {strides = array<i32>} : memref<1x8x128xf32, #tpu.memory_space<vmem>>, vector<1x8x128xf32>,
    return
  }
  func.func @transform_0(%arg0: i32) -> i32 {
    %c0_i32 = arith.constant 0 : i32
    %c0_i32_0 = arith.constant 0 : i32
    return %c0_i32 : i32
  }
  func.func @transform_1(%arg0: i32) -> (i32, i32, i32, i32) {
    %c0_i32 = arith.constant 0 : i32
    %c0_i32_0 = arith.constant 0 : i32
    %c0_i32_1 = arith.constant 0 : i32
    %c0_i32_2 = arith.constant 0 : i32
    return %c0_i32, %arg0, %c0_i32_0, %c0_i32_1 : i32, i32, i32, i32
  }
  func.func @transform_2(%arg0: i32) -> (i32, i32, i32) {
    %c0_i32 = arith.constant 0 : i32
    %c0_i32_0 = arith.constant 0 : i32
    %c0_i32_1 = arith.constant 0 : i32
    return %arg0, %c0_i32, %c0_i32_0 : i32, i32, i32
  }
}

</mosaic_0001>

<llo_original>
// kernel: discriminator_forward.1
$region0: #{discriminator_forward.1}
  #allocation0 [shape = 'u32[]', space=smem, size = 0x4, offset = 0x4, fixed_abs, tag = 'smem constant byte address 0x4 - core index']
  #allocation1 [shape = 'u32[72,128]{1,0:T(1,128)}', space=vmem, size = 0x9000, scoped, tag = 'internal scratch']
  %s0 = inlined_call_operand.vmem [shape: f32[19], index: 0, kind: input, shape index: {}]
  %s1 = inlined_call_operand.vmem [shape: f32[4,1,8,128], index: 1, kind: input, shape index: {}]
  %s2 = inlined_call_operand.vmem [shape: f32[1,8,128], index: 2, kind: output, shape index: {}]
  %s3 = sld [smem:[#allocation0]]
  $region22: #{discriminator_forward.1} parent=0
    _
  %s5 = ssub.s32 1, %s3
  %s6 = scalar_select 0, %s5, %s3
  $region1: #{discriminator_forward.1} parent=0
    #allocation2 [shape = 'u8[512]{0}', space=smem, size = 0x200, scoped, tag = 'input window, operand 0, single buffered']
    #allocation3 [shape = 's32[1]{0}', space=sflag, size = 0x4, scoped, tag = 'scoped memory for discriminator_forward.1']
    %7 = vsyncpa [#allocation3], 0
    // Predicated region
    $region2: #{discriminator_forward.1} parent=1 // pred_check
      _
    $region3: #{discriminator_forward.1} parent=1 // pred_check_branch
      %9 = sbr.rel (0) target = $region5
    $region4: #{discriminator_forward.1} parent=1 // pred_region
      %11 = vsyncadd [#allocation3], 0
      %s13 = sshll.u32 %s0, 4
      %s14 = int_to_ptr.vmem [resolvable:$true] %s13
      %16 = dma.vmem_to_smem %s14, 16, [#allocation2], [#allocation3]
    $region5: #{discriminator_forward.1} parent=1 // pred_fallthru
      _
    // Predicated region
    $region6: #{discriminator_forward.1} parent=1 // pred_check
      _
    $region7: #{discriminator_forward.1} parent=1 // pred_check_branch
      %18 = sbr.rel (0) target = $region9
    $region8: #{discriminator_forward.1} parent=1 // pred_region
      _
    $region9: #{discriminator_forward.1} parent=1 // pred_fallthru
      _
    // Predicated region
    $region10: #{discriminator_forward.1} parent=1 // pred_check
      _
    $region11: #{discriminator_forward.1} parent=1 // pred_check_branch
      %20 = sbr.rel (0) target = $region13
    $region12: #{discriminator_forward.1} parent=1 // pred_region
      %22 = dma.done [#allocation3], 16
    $region13: #{discriminator_forward.1} parent=1 // pred_fallthru
      _
    %23 = sfence
    %v24 = vld [vmem:[%s1] sm:$0xff]
    %v25 = vld [vmem:[%s1 + $0x8] sm:$0xff]
    %v26 = vld [vmem:[%s1 + $0x10] sm:$0xff]
    %v27 = vld [vmem:[%s1 + $0x18] sm:$0xff]
    %s28 = sld [smem:[#allocation2]]
    %v29 = vstv %s28
    %v30 = vmul.f32 %v24, %v29
    %s31 = sld [smem:[#allocation2 + $0x3]]
    %v32 = vstv %s31
    %v33 = vmul.f32 %v25, %v32
    %v34 = vadd.f32 %v30, %v33
    %s35 = sld [smem:[#allocation2 + $0x6]]
    %v36 = vstv %s35
    %v37 = vmul.f32 %v26, %v36
    %v38 = vadd.f32 %v34, %v37
    %s39 = sld [smem:[#allocation2 + $0x9]]
    %v40 = vstv %s39
    %v41 = vmul.f32 %v27, %v40
    %v42 = vadd.f32 %v38, %v41
    %s43 = sld [smem:[#allocation2 + $0xc]]
    %v44 = vstv %s43
    %v45 = vadd.f32 %v42, %v44
    %v46 = vtanh.pop %v45
    %s47 = sld [smem:[#allocation2 + $0x1]]
    %v48 = vstv %s47
    %v49 = vmul.f32 %v24, %v48
    %s50 = sld [smem:[#allocation2 + $0x4]]
    %v51 = vstv %s50
    %v52 = vmul.f32 %v25, %v51
    %v53 = vadd.f32 %v49, %v52
    %s54 = sld [smem:[#allocation2 + $0x7]]
    %v55 = vstv %s54
    %v56 = vmul.f32 %v26, %v55
    %v57 = vadd.f32 %v53, %v56
    %s58 = sld [smem:[#allocation2 + $0xa]]
    %v59 = vstv %s58
    %v60 = vmul.f32 %v27, %v59
    %v61 = vadd.f32 %v57, %v60
    %s62 = sld [smem:[#allocation2 + $0xd]]
    %v63 = vstv %s62
    %v64 = vadd.f32 %v61, %v63
    %v65 = vtanh.pop %v64
    %s66 = sld [smem:[#allocation2 + $0x2]]
    %v67 = vstv %s66
    %v68 = vmul.f32 %v24, %v67
    %s69 = sld [smem:[#allocation2 + $0x5]]
    %v70 = vstv %s69
    %v71 = vmul.f32 %v25, %v70
    %v72 = vadd.f32 %v68, %v71
    %s73 = sld [smem:[#allocation2 + $0x8]]
    %v74 = vstv %s73
    %v75 = vmul.f32 %v26, %v74
    %v76 = vadd.f32 %v72, %v75
    %s77 = sld [smem:[#allocation2 + $0xb]]
    %v78 = vstv %s77
    %v79 = vmul.f32 %v27, %v78
    %v80 = vadd.f32 %v76, %v79
    %s81 = sld [smem:[#allocation2 + $0xe]]
    %v82 = vstv %s81
    %v83 = vadd.f32 %v80, %v82
    %v84 = vtanh.pop %v83
    %s85 = sld [smem:[#allocation2 + $0xf]]
    %v86 = vstv %s85
    %v87 = vmul.f32 %v46, %v86
    %s88 = sld [smem:[#allocation2 + $0x10]]
    %v89 = vstv %s88
    %v90 = vmul.f32 %v65, %v89
    %v91 = vadd.f32 %v87, %v90
    %s92 = sld [smem:[#allocation2 + $0x11]]
    %v93 = vstv %s92
    %v94 = vmul.f32 %v84, %v93
    %v95 = vadd.f32 %v91, %v94
    %s96 = sld [smem:[#allocation2 + $0x12]]
    %v97 = vstv %s96
    %v98 = vadd.f32 %v95, %v97
    %v99 = vtanh.pop %v98
    %v100 = vmul.f32 %v99, 0.5
    %v101 = vadd.f32 %v100, 0.5
    %102 = vst [vmem:[%s2] sm:$0xff] %v101
    // Predicated region
    $region14: #{discriminator_forward.1} parent=1 // pred_check
      _
    $region15: #{discriminator_forward.1} parent=1 // pred_check_branch
      %104 = sbr.rel (0) target = $region17
    $region16: #{discriminator_forward.1} parent=1 // pred_region
      _
    $region17: #{discriminator_forward.1} parent=1 // pred_fallthru
      _
    // Predicated region
    $region18: #{discriminator_forward.1} parent=1 // pred_check
      _
    $region19: #{discriminator_forward.1} parent=1 // pred_check_branch
      %106 = sbr.rel (0) target = $region21
    $region20: #{discriminator_forward.1} parent=1 // pred_region
      _
    $region21: #{discriminator_forward.1} parent=1 // pred_fallthru
      _
    %107 = vsyncpa [#allocation3], 1

</llo_original>
